<compile_context>
chip_gen: v5e
topology: v5e:2x2
jax: 0.10.0
libtpu: 0.0.40
codegen_flags: <defaults>
</compile_context>

<pallas_src>
import functools

import jax
import jax.numpy as jnp
from jax.experimental import pallas as pl
from jax.experimental.pallas import tpu as pltpu


def _round_up(x: int, m: int) -> int:
    return ((x + m - 1) // m) * m


def _fused_mlp_kernel(*refs, n_layers: int, compute_dtype, neg_slope: float):
    """Fused MLP: refs = (x_ref, w0, b0, w1, b1, ..., w_{n-1}, b_{n-1}, o_ref).

    x_ref: (tm, d_in)  w_i: (in_i, out_i)  b_i: (1, out_i)  o_ref: (tm, out_last)
    Intermediate activations stay in registers/VMEM (never written to HBM).
    """
    x_ref = refs[0]
    o_ref = refs[-1]
    wb = refs[1:-1]

    x = x_ref[...].astype(jnp.float32)
    for i in range(n_layers):
        w = wb[2 * i][...]
        b = wb[2 * i + 1][...]
        # MXU matmul in bf16 with f32 accumulation.
        y = jnp.dot(x.astype(compute_dtype), w.astype(compute_dtype),
                    preferred_element_type=jnp.float32)
        y = y + b.astype(jnp.float32)               # bias in f32
        if i + 1 < n_layers:
            y = jnp.where(y >= 0, y, neg_slope * y)  # LeakyReLU(0.1) in f32
        x = y
    o_ref[...] = x.astype(o_ref.dtype)


def engen_decoder_forward(z, params, *, negative_slope: float = 0.1,
                          compute_dtype=jnp.bfloat16, block_batch: int = 128):
    """Forward pass of EnGen_Decoder as a single fused Pallas kernel.

    z: (B, latent_size) f32.  params: list of (w_t, b) with w_t: (in, out), b: (out,).
    """
    B, d_in = z.shape
    n_layers = len(params)
    out_dim = params[-1][0].shape[1]

    # Batch tiling: tile size is a multiple of 8 (sublane); pad batch if needed.
    tm = min(block_batch, _round_up(B, 8))
    B_pad = _round_up(B, tm)
    if B_pad != B:
        z = jnp.pad(z, ((0, B_pad - B), (0, 0)))
    grid = (B_pad // tm,)

    in_specs = [pl.BlockSpec((tm, d_in), lambda i: (i, 0))]
    flat_inputs = [z]
    for (w_t, b) in params:
        in_i, out_i = w_t.shape
        # Full weight / bias blocks, constant index_map -> resident across batch tiles.
        in_specs.append(pl.BlockSpec((in_i, out_i), lambda i: (0, 0)))
        in_specs.append(pl.BlockSpec((1, out_i), lambda i: (0, 0)))
        flat_inputs.append(w_t)
        flat_inputs.append(b.reshape(1, out_i))

    kernel = functools.partial(
        _fused_mlp_kernel,
        n_layers=n_layers,
        compute_dtype=compute_dtype,
        neg_slope=negative_slope,
    )

    out = pl.pallas_call(
        kernel,
        out_shape=jax.ShapeDtypeStruct((B_pad, out_dim), z.dtype),
        grid=grid,
        in_specs=in_specs,
        out_specs=pl.BlockSpec((tm, out_dim), lambda i: (i, 0)),
        compiler_params=pltpu.CompilerParams(
            dimension_semantics=("parallel",)),
    )(*flat_inputs)

    return out[:B] if B_pad != B else out


def init_engen_decoder_params(key, latent_size, layer_sizes,
                              weight_dtype=jnp.bfloat16, bias_dtype=jnp.float32):
    """Init mimicking torch.nn.Linear default (U[-1/sqrt(fan_in), 1/sqrt(fan_in)]).

    Weights stored already transposed (in, out) and in bf16 (halves HBM DMA);
    biases stay f32 (added in f32 epilogue).
    """
    params = []
    in_sizes = [latent_size] + list(layer_sizes[:-1])
    for in_size, out_size in zip(in_sizes, layer_sizes):
        key, kw, kb = jax.random.split(key, 3)
        bound = 1.0 / (in_size ** 0.5)
        w_t = jax.random.uniform(kw, (in_size, out_size), dtype=jnp.float32,
                                 minval=-bound, maxval=bound).astype(weight_dtype)
        b = jax.random.uniform(kb, (out_size,), dtype=jnp.float32,
                               minval=-bound, maxval=bound).astype(bias_dtype)
        params.append((w_t, b))
    return params


def engen_decoder_reference(z, params, *, negative_slope: float = 0.1,
                            compute_dtype=jnp.bfloat16):
    """Pure-JAX reference with identical casting (bf16 operands, f32 accumulate)."""
    x = z.astype(jnp.float32)
    n = len(params)
    for i, (w_t, b) in enumerate(params):
        y = jnp.dot(x.astype(compute_dtype), w_t.astype(compute_dtype),
                    preferred_element_type=jnp.float32)
        y = y + b.astype(jnp.float32)
        if i + 1 < n:
            y = jnp.where(y >= 0, y, negative_slope * y)
        x = y
    return x


if __name__ == "__main__":
    key = jax.random.PRNGKey(0)

    # Small shapes consistent with the module's forward: z is (batch, latent_size).
    batch = 8
    latent_size = 32
    layer_sizes = [64, 128, 256]

    kp, kz = jax.random.split(key)
    params = init_engen_decoder_params(kp, latent_size, layer_sizes)
    z = jax.random.normal(kz, (batch, latent_size), dtype=jnp.float32)

    out = engen_decoder_forward(z, params)
    out = jax.block_until_ready(out)

    ref = engen_decoder_reference(z, params)
    assert out.shape == (batch, layer_sizes[-1]), out.shape
    assert jnp.allclose(out, ref, atol=1e-4, rtol=1e-4), "mismatch vs reference"

    print("KERNEL_OK")
</pallas_src>

<mosaic_0001>
module attributes {stable_mosaic.version = 11 : i64} {
  func.func @_fused_mlp_kernel(%arg0: i32, %arg1: memref<8x32xf32, #tpu.memory_space<vmem>>, %arg2: memref<32x64xbf16, #tpu.memory_space<vmem>>, %arg3: memref<1x64xf32, #tpu.memory_space<vmem>>, %arg4: memref<64x128xbf16, #tpu.memory_space<vmem>>, %arg5: memref<1x128xf32, #tpu.memory_space<vmem>>, %arg6: memref<128x256xbf16, #tpu.memory_space<vmem>>, %arg7: memref<1x256xf32, #tpu.memory_space<vmem>>, %arg8: memref<8x256xf32, #tpu.memory_space<vmem>>) attributes {dimension_semantics = [#tpu.dimension_semantics<parallel>], iteration_bounds = array<i64: 1>, scalar_prefetch = 0 : i64, scratch_operands = 0 : i64, tpu.core_type = #tpu.core_type<tc>, window_params = [{transform_indices = @transform_0, window_bounds = array<i64: 8, 32>}, {pipeline_mode = #tpu.pipeline_mode<synchronous>, transform_indices = @transform_1, window_bounds = array<i64: 32, 64>}, {pipeline_mode = #tpu.pipeline_mode<synchronous>, transform_indices = @transform_2, window_bounds = array<i64: 1, 64>}, {pipeline_mode = #tpu.pipeline_mode<synchronous>, transform_indices = @transform_3, window_bounds = array<i64: 64, 128>}, {pipeline_mode = #tpu.pipeline_mode<synchronous>, transform_indices = @transform_4, window_bounds = array<i64: 1, 128>}, {pipeline_mode = #tpu.pipeline_mode<synchronous>, transform_indices = @transform_5, window_bounds = array<i64: 128, 256>}, {pipeline_mode = #tpu.pipeline_mode<synchronous>, transform_indices = @transform_6, window_bounds = array<i64: 1, 256>}, {transform_indices = @transform_7, window_bounds = array<i64: 8, 256>}]} {
    %c0 = arith.constant 0 : index
    %c0_0 = arith.constant 0 : index
    %0 = vector.load %arg1[%c0, %c0_0] : memref<8x32xf32, #tpu.memory_space<vmem>>, vector<8x32xf32>
    %c0_1 = arith.constant 0 : index
    %c0_2 = arith.constant 0 : index
    %1 = vector.load %arg2[%c0_1, %c0_2] : memref<32x64xbf16, #tpu.memory_space<vmem>>, vector<32x64xbf16>
    %c0_3 = arith.constant 0 : index
    %c0_4 = arith.constant 0 : index
    %2 = vector.load %arg3[%c0_3, %c0_4] : memref<1x64xf32, #tpu.memory_space<vmem>>, vector<1x64xf32>
    %3 = arith.truncf %0 : vector<8x32xf32> to vector<8x32xbf16>
    %cst = arith.constant dense<0.000000e+00> : vector<8x64xf32>
    %4 = tpu.matmul %3, %1, %cst {dimension_numbers = #tpu.dot_dimension_numbers<[1], [0], [0], [1], [0, 0, 1, 1], [], []>} : vector<8x32xbf16>, vector<32x64xbf16>, vector<8x64xf32> -> vector<8x64xf32>
    %5 = vector.broadcast %2 : vector<1x64xf32> to vector<8x64xf32>
    %6 = arith.addf %4, %5 : vector<8x64xf32>
    %cst_5 = arith.constant 0.000000e+00 : f32
    %7 = vector.broadcast %cst_5 : f32 to vector<8x64xf32>
    %8 = arith.cmpf oge, %6, %7 : vector<8x64xf32>
    %cst_6 = arith.constant 1.000000e-01 : f32
    %9 = vector.broadcast %cst_6 : f32 to vector<8x64xf32>
    %10 = arith.mulf %9, %6 : vector<8x64xf32>
    %11 = arith.select %8, %6, %10 : vector<8x64xi1>, vector<8x64xf32>
    %c0_7 = arith.constant 0 : index
    %c0_8 = arith.constant 0 : index
    %12 = vector.load %arg4[%c0_7, %c0_8] : memref<64x128xbf16, #tpu.memory_space<vmem>>, vector<64x128xbf16>
    %c0_9 = arith.constant 0 : index
    %c0_10 = arith.constant 0 : index
    %13 = vector.load %arg5[%c0_9, %c0_10] : memref<1x128xf32, #tpu.memory_space<vmem>>, vector<1x128xf32>
    %14 = arith.truncf %11 : vector<8x64xf32> to vector<8x64xbf16>
    %cst_11 = arith.constant dense<0.000000e+00> : vector<8x128xf32>
    %15 = tpu.matmul %14, %12, %cst_11 {dimension_numbers = #tpu.dot_dimension_numbers<[1], [0], [0], [1], [0, 0, 1, 1], [], []>} : vector<8x64xbf16>, vector<64x128xbf16>, vector<8x128xf32> -> vector<8x128xf32>
    %16 = vector.broadcast %13 : vector<1x128xf32> to vector<8x128xf32>
    %17 = arith.addf %15, %16 : vector<8x128xf32>
    %cst_12 = arith.constant 0.000000e+00 : f32
    %18 = vector.broadcast %cst_12 : f32 to vector<8x128xf32>
    %19 = arith.cmpf oge, %17, %18 : vector<8x128xf32>
    %cst_13 = arith.constant 1.000000e-01 : f32
    %20 = vector.broadcast %cst_13 : f32 to vector<8x128xf32>
    %21 = arith.mulf %20, %17 : vector<8x128xf32>
    %22 = arith.select %19, %17, %21 : vector<8x128xi1>, vector<8x128xf32>
    %c0_14 = arith.constant 0 : index
    %c0_15 = arith.constant 0 : index
    %23 = vector.load %arg6[%c0_14, %c0_15] : memref<128x256xbf16, #tpu.memory_space<vmem>>, vector<128x256xbf16>
    %c0_16 = arith.constant 0 : index
    %c0_17 = arith.constant 0 : index
    %24 = vector.load %arg7[%c0_16, %c0_17] : memref<1x256xf32, #tpu.memory_space<vmem>>, vector<1x256xf32>
    %25 = arith.truncf %22 : vector<8x128xf32> to vector<8x128xbf16>
    %cst_18 = arith.constant dense<0.000000e+00> : vector<8x256xf32>
    %26 = tpu.matmul %25, %23, %cst_18 {dimension_numbers = #tpu.dot_dimension_numbers<[1], [0], [0], [1], [0, 0, 1, 1], [], []>} : vector<8x128xbf16>, vector<128x256xbf16>, vector<8x256xf32> -> vector<8x256xf32>
    %27 = vector.broadcast %24 : vector<1x256xf32> to vector<8x256xf32>
    %28 = arith.addf %26, %27 : vector<8x256xf32>
    %c0_19 = arith.constant 0 : index
    %c0_20 = arith.constant 0 : index
    %29 = vector.load %arg8[%c0_19, %c0_20] : memref<8x256xf32, #tpu.memory_space<vmem>>, vector<8x256xf32>
    tpu.vector_store %arg8[%c0_19, %c0_20], %28 {strides = array<i32>} : memref<8x256xf32, #tpu.memory_space<vmem>>, vector<8x256xf32>,
    return
  }
  func.func @transform_0(%arg0: i32) -> (i32, i32) {
    %c0_i32 = arith.constant 0 : i32
    %c0_i32_0 = arith.constant 0 : i32
    return %arg0, %c0_i32 : i32, i32
  }
  func.func @transform_1(%arg0: i32) -> (i32, i32) {
    %c0_i32 = arith.constant 0 : i32
    %c0_i32_0 = arith.constant 0 : i32
    %c0_i32_1 = arith.constant 0 : i32
    return %c0_i32, %c0_i32_0 : i32, i32
  }
  func.func @transform_2(%arg0: i32) -> (i32, i32) {
    %c0_i32 = arith.constant 0 : i32
    %c0_i32_0 = arith.constant 0 : i32
    %c0_i32_1 = arith.constant 0 : i32
    return %c0_i32, %c0_i32_0 : i32, i32
  }
  func.func @transform_3(%arg0: i32) -> (i32, i32) {
    %c0_i32 = arith.constant 0 : i32
    %c0_i32_0 = arith.constant 0 : i32
    %c0_i32_1 = arith.constant 0 : i32
    return %c0_i32, %c0_i32_0 : i32, i32
  }
  func.func @transform_4(%arg0: i32) -> (i32, i32) {
    %c0_i32 = arith.constant 0 : i32
    %c0_i32_0 = arith.constant 0 : i32
    %c0_i32_1 = arith.constant 0 : i32
    return %c0_i32, %c0_i32_0 : i32, i32
  }
  func.func @transform_5(%arg0: i32) -> (i32, i32) {
    %c0_i32 = arith.constant 0 : i32
    %c0_i32_0 = arith.constant 0 : i32
    %c0_i32_1 = arith.constant 0 : i32
    return %c0_i32, %c0_i32_0 : i32, i32
  }
  func.func @transform_6(%arg0: i32) -> (i32, i32) {
    %c0_i32 = arith.constant 0 : i32
    %c0_i32_0 = arith.constant 0 : i32
    %c0_i32_1 = arith.constant 0 : i32
    return %c0_i32, %c0_i32_0 : i32, i32
  }
  func.func @transform_7(%arg0: i32) -> (i32, i32) {
    %c0_i32 = arith.constant 0 : i32
    %c0_i32_0 = arith.constant 0 : i32
    return %arg0, %c0_i32 : i32, i32
  }
}

</mosaic_0001>

<llo_original>
// kernel: tpu_custom_call.1
$region0: #{tpu_custom_call.1}
  #allocation0 [shape = 'u32[]', space=smem, size = 0x4, offset = 0x4, fixed_abs, tag = 'smem constant byte address 0x4 - core index']
  #allocation1 [shape = 'u32[72,128]{1,0:T(1,128)}', space=vmem, size = 0x9000, scoped, tag = 'internal scratch']
  %s0 = inlined_call_operand.hbm [shape: f32[8,32], index: 0, kind: input, shape index: {}]
  %s1 = inlined_call_operand.hbm [shape: bf16[32,64], index: 1, kind: input, shape index: {}]
  %s2 = inlined_call_operand.vmem [shape: f32[1,64], index: 2, kind: input, shape index: {}]
  %s3 = inlined_call_operand.hbm [shape: bf16[64,128], index: 3, kind: input, shape index: {}]
  %s4 = inlined_call_operand.hbm [shape: f32[1,128], index: 4, kind: input, shape index: {}]
  %s5 = inlined_call_operand.hbm [shape: bf16[128,256], index: 5, kind: input, shape index: {}]
  %s6 = inlined_call_operand.vmem [shape: f32[1,256], index: 6, kind: input, shape index: {}]
  %s7 = inlined_call_operand.hbm [shape: f32[8,256], index: 7, kind: output, shape index: {}]
  %s8 = sld [smem:[#allocation0]]
  $region58: #{tpu_custom_call.1} parent=0
    _
  %s10 = ssub.s32 1, %s8
  %s11 = scalar_select 0, %s10, %s8
  $region1: #{tpu_custom_call.1} parent=0
    #allocation2 [shape = 'u8[4096]{0}', space=vmem, size = 0x1000, scoped, tag = 'input window, operand 0, single buffered']
    #allocation3 [shape = 's32[1]{0}', space=sflag, size = 0x4, scoped, tag = 'scoped memory for tpu_custom_call.1']
    #allocation4 [shape = 's32[1]{0}', space=sflag, size = 0x4, scoped, tag = 'scoped memory for tpu_custom_call.1']
    #allocation5 [shape = 'u8[8192]{0}', space=vmem, size = 0x2000, scoped, tag = 'input window, operand 1, single buffered']
    #allocation6 [shape = 's32[1]{0}', space=sflag, size = 0x4, scoped, tag = 'scoped memory for tpu_custom_call.1']
    #allocation7 [shape = 'u8[16384]{0}', space=vmem, size = 0x4000, scoped, tag = 'input window, operand 3, single buffered']
    #allocation8 [shape = 'u8[512]{0}', space=vmem, size = 0x400, scoped, tag = 'input window, operand 4, single buffered']
    #allocation9 [shape = 's32[1]{0}', space=sflag, size = 0x4, scoped, tag = 'scoped memory for tpu_custom_call.1']
    #allocation10 [shape = 'u8[65536]{0}', space=vmem, size = 0x10000, scoped, tag = 'input window, operand 5, single buffered']
    #allocation11 [shape = 'u8[8192]{0}', space=vmem, size = 0x2000, scoped, tag = 'output window, operand 0, single buffered']
    %12 = vsyncpa [#allocation3], 0
    %13 = vsyncpa [#allocation6], 0
    %14 = vsyncpa [#allocation9], 0
    %15 = vsyncpa [#allocation4], 0
    // Predicated region
    $region2: #{tpu_custom_call.1} parent=1 // pred_check
      _
    $region3: #{tpu_custom_call.1} parent=1 // pred_check_branch
      %17 = sbr.rel (0) target = $region5
    $region4: #{tpu_custom_call.1} parent=1 // pred_region
      %19 = vsyncadd [#allocation3], 0
      %s21 = sshll.u32 %s0, 4
      %s22 = int_to_ptr.hbm [resolvable:$true] %s21
      %s23 = sshll.u32 [#allocation2], 4
      %s24 = int_to_ptr.vmem [resolvable:$true] %s23
      %26 = dma.hbm_to_vmem [thread:$0]  %s22, 128, %s24, [#allocation3]
    $region5: #{tpu_custom_call.1} parent=1 // pred_fallthru
      _
    // Predicated region
    $region6: #{tpu_custom_call.1} parent=1 // pred_check
      _
    $region7: #{tpu_custom_call.1} parent=1 // pred_check_branch
      %28 = sbr.rel (0) target = $region9
    $region8: #{tpu_custom_call.1} parent=1 // pred_region
      %30 = vsyncadd [#allocation6], 0
      %s31 = sshll.u32 %s1, 4
      %s32 = int_to_ptr.hbm [resolvable:$true] %s31
      %s33 = sshll.u32 [#allocation5], 4
      %s34 = int_to_ptr.vmem [resolvable:$true] %s33
      %39 = dma.hbm_to_vmem [thread:$0]  %s32, 256, %s34, [#allocation6], 64, 64, 4
    $region9: #{tpu_custom_call.1} parent=1 // pred_fallthru
      _
    // Predicated region
    $region10: #{tpu_custom_call.1} parent=1 // pred_check
      _
    $region11: #{tpu_custom_call.1} parent=1 // pred_check_branch
      %41 = sbr.rel (0) target = $region13
    $region12: #{tpu_custom_call.1} parent=1 // pred_region
      _
    $region13: #{tpu_custom_call.1} parent=1 // pred_fallthru
      _
    // Predicated region
    $region14: #{tpu_custom_call.1} parent=1 // pred_check
      _
    $region15: #{tpu_custom_call.1} parent=1 // pred_check_branch
      %43 = sbr.rel (0) target = $region17
    $region16: #{tpu_custom_call.1} parent=1 // pred_region
      %45 = vsyncadd [#allocation6], 0
      %s46 = sshll.u32 %s3, 4
      %s47 = int_to_ptr.hbm [resolvable:$true] %s46
      %s48 = sshll.u32 [#allocation7], 4
      %s49 = int_to_ptr.vmem [resolvable:$true] %s48
      %54 = dma.hbm_to_vmem [thread:$0]  %s47, 512, %s49, [#allocation6], 64, 64, 4
    $region17: #{tpu_custom_call.1} parent=1 // pred_fallthru
      _
    // Predicated region
    $region18: #{tpu_custom_call.1} parent=1 // pred_check
      _
    $region19: #{tpu_custom_call.1} parent=1 // pred_check_branch
      %56 = sbr.rel (0) target = $region21
    $region20: #{tpu_custom_call.1} parent=1 // pred_region
      %58 = vsyncadd [#allocation9], 0
      %s60 = sshll.u32 %s4, 4
      %s61 = int_to_ptr.hbm [resolvable:$true] %s60
      %s62 = sshll.u32 [#allocation8], 4
      %s63 = int_to_ptr.vmem [resolvable:$true] %s62
      %65 = dma.hbm_to_vmem [thread:$0]  %s61, 16, %s63, [#allocation9]
    $region21: #{tpu_custom_call.1} parent=1 // pred_fallthru
      _
    // Predicated region
    $region22: #{tpu_custom_call.1} parent=1 // pred_check
      _
    $region23: #{tpu_custom_call.1} parent=1 // pred_check_branch
      %67 = sbr.rel (0) target = $region25
    $region24: #{tpu_custom_call.1} parent=1 // pred_region
      %69 = vsyncadd [#allocation9], 0
      %s70 = sshll.u32 %s5, 4
      %s71 = int_to_ptr.hbm [resolvable:$true] %s70
      %s72 = sshll.u32 [#allocation10], 4
      %s73 = int_to_ptr.vmem [resolvable:$true] %s72
      %78 = dma.hbm_to_vmem [thread:$0]  %s71, 2048, %s73, [#allocation9], 128, 128, 8
    $region25: #{tpu_custom_call.1} parent=1 // pred_fallthru
      _
    // Predicated region
    $region26: #{tpu_custom_call.1} parent=1 // pred_check
      _
    $region27: #{tpu_custom_call.1} parent=1 // pred_check_branch
      %80 = sbr.rel (0) target = $region29
    $region28: #{tpu_custom_call.1} parent=1 // pred_region
      _
    $region29: #{tpu_custom_call.1} parent=1 // pred_fallthru
      _
    // Predicated region
    $region30: #{tpu_custom_call.1} parent=1 // pred_check
      _
    $region31: #{tpu_custom_call.1} parent=1 // pred_check_branch
      %82 = sbr.rel (0) target = $region33
    $region32: #{tpu_custom_call.1} parent=1 // pred_region
      %84 = dma.done [#allocation3], 128
    $region33: #{tpu_custom_call.1} parent=1 // pred_fallthru
      _
    // Predicated region
    $region34: #{tpu_custom_call.1} parent=1 // pred_check
      _
    $region35: #{tpu_custom_call.1} parent=1 // pred_check_branch
      %86 = sbr.rel (0) target = $region37
    $region36: #{tpu_custom_call.1} parent=1 // pred_region
      %88 = dma.done [#allocation6], 256
    $region37: #{tpu_custom_call.1} parent=1 // pred_fallthru
      _
    // Predicated region
    $region38: #{tpu_custom_call.1} parent=1 // pred_check
      _
    $region39: #{tpu_custom_call.1} parent=1 // pred_check_branch
      %90 = sbr.rel (0) target = $region41
    $region40: #{tpu_custom_call.1} parent=1 // pred_region
      %92 = dma.done [#allocation6], 512
    $region41: #{tpu_custom_call.1} parent=1 // pred_fallthru
      _
    // Predicated region
    $region42: #{tpu_custom_call.1} parent=1 // pred_check
      _
    $region43: #{tpu_custom_call.1} parent=1 // pred_check_branch
      %94 = sbr.rel (0) target = $region45
    $region44: #{tpu_custom_call.1} parent=1 // pred_region
      %96 = dma.done [#allocation9], 16
    $region45: #{tpu_custom_call.1} parent=1 // pred_fallthru
      _
    // Predicated region
    $region46: #{tpu_custom_call.1} parent=1 // pred_check
      _
    $region47: #{tpu_custom_call.1} parent=1 // pred_check_branch
      %98 = sbr.rel (0) target = $region49
    $region48: #{tpu_custom_call.1} parent=1 // pred_region
      %100 = dma.done [#allocation9], 2048
    $region49: #{tpu_custom_call.1} parent=1 // pred_fallthru
      _
    %v102 = vld [vmem:[#allocation2] sm:$0xff]
    %v103 = vld [vmem:[#allocation5] sm:$0xf]
    %v104 = vld [vmem:[#allocation5 + $0x4] sm:$0xf]
    %v105 = vld [vmem:[#allocation5 + $0x8] sm:$0xf]
    %v106 = vld [vmem:[#allocation5 + $0xc] sm:$0xf]
    %v107 = vld [vmem:[%s2] sm:$0x1]
    %v108 = vpack.c.bf16 %v102, %v102
    %v110 = vperm.slane %v107, 0
    %v116 = vunpack.c.l.b16 %v103
    %v117 = vunpack.c.l.b16 %v104
    %v118 = vunpack.c.l.b16 %v105
    %v119 = vunpack.c.l.b16 %v106
    %v120 = vpack.c.b16 %v117, %v116
    %v121 = vpack.c.b16 %v119, %v118
    %vm124 = vcmask 261120
    %v126 = vsel %vm124, %v108, 0
    %128 = vmatpush.bf16.msra.mxu0 0
    %129 = vmatpush.bf16.msra.mxu0 0
    %130 = vmatpush.bf16.msra.mxu0 0
    %131 = vmatpush.bf16.msra.mxu0 0
    %132 = vmatpush.bf16.msra.mxu0 0
    %133 = vmatpush.bf16.msra.mxu0 0
    %134 = vmatpush.bf16.msra.mxu0 %v121
    %135 = vmatpush.bf16.msra.mxu0 %v120
    %136 = vmatmul.bf16.gmra.mxu0 %v126
    %v137 = vpop.f32.mrf.mxu0
    %v138 = vadd.f32 %v110, %v137
    %v139 = vpop.f32.mrf.mxu0
    %140 = vdwg.mxu0
    %vm141 = vcmp.ge.f32.partialorder %v138, 0.0
    %v142 = vmul.f32 %v138, 0.1
    %v143 = vsel %vm141, %v138, %v142
    %v144 = vld [vmem:[#allocation7] sm:$0xf]
    %v145 = vld [vmem:[#allocation7 + $0x4] sm:$0xf]
    %v146 = vld [vmem:[#allocation7 + $0x8] sm:$0xf]
    %v147 = vld [vmem:[#allocation7 + $0xc] sm:$0xf]
    %v148 = vld [vmem:[#allocation7 + $0x10] sm:$0xf]
    %v149 = vld [vmem:[#allocation7 + $0x14] sm:$0xf]
    %v150 = vld [vmem:[#allocation7 + $0x18] sm:$0xf]
    %v151 = vld [vmem:[#allocation7 + $0x1c] sm:$0xf]
    %v152 = vld [vmem:[#allocation8] sm:$0x1]
    %v153 = vpack.c.bf16 %v143, %v143
    %v155 = vperm.slane %v152, 0
    %v165 = vunpack.c.l.b16 %v144
    %v166 = vunpack.c.l.b16 %v145
    %v167 = vunpack.c.l.b16 %v146
    %v168 = vunpack.c.l.b16 %v147
    %v169 = vunpack.c.l.b16 %v148
    %v170 = vunpack.c.l.b16 %v149
    %v171 = vunpack.c.l.b16 %v150
    %v172 = vunpack.c.l.b16 %v151
    %v173 = vpack.c.b16 %v166, %v165
    %v174 = vpack.c.b16 %v168, %v167
    %v175 = vpack.c.b16 %v170, %v169
    %v176 = vpack.c.b16 %v172, %v171
    %vm181 = vcmask 523264
    %v183 = vsel %vm181, %v153, 0
    %185 = vmatpush.bf16.msra.mxu0 0
    %186 = vmatpush.bf16.msra.mxu0 0
    %187 = vmatpush.bf16.msra.mxu0 0
    %188 = vmatpush.bf16.msra.mxu0 0
    %189 = vmatpush.bf16.msra.mxu0 %v176
    %190 = vmatpush.bf16.msra.mxu0 %v175
    %191 = vmatpush.bf16.msra.mxu0 %v174
    %192 = vmatpush.bf16.msra.mxu0 %v173
    %193 = vmatmul.bf16.gmra.mxu0 %v183
    %v194 = vpop.f32.mrf.mxu0
    %v195 = vadd.f32 %v155, %v194
    %v196 = vpop.f32.mrf.mxu0
    %197 = vdwg.mxu0
    %vm198 = vcmp.ge.f32.partialorder %v195, 0.0
    %v199 = vmul.f32 %v195, 0.1
    %v200 = vsel %vm198, %v195, %v199
    %v201 = vld [vmem:[#allocation10] sm:$0xff]
    %v202 = vld [vmem:[#allocation10 + $0x8] sm:$0xff]
    %v203 = vld [vmem:[#allocation10 + $0x10] sm:$0xff]
    %v204 = vld [vmem:[#allocation10 + $0x18] sm:$0xff]
    %v205 = vld [vmem:[#allocation10 + $0x20] sm:$0xff]
    %v206 = vld [vmem:[#allocation10 + $0x28] sm:$0xff]
    %v207 = vld [vmem:[#allocation10 + $0x30] sm:$0xff]
    %v208 = vld [vmem:[#allocation10 + $0x38] sm:$0xff]
    %v209 = vld [vmem:[#allocation10 + $0x40] sm:$0xff]
    %v210 = vld [vmem:[#allocation10 + $0x48] sm:$0xff]
    %v211 = vld [vmem:[#allocation10 + $0x50] sm:$0xff]
    %v212 = vld [vmem:[#allocation10 + $0x58] sm:$0xff]
    %v213 = vld [vmem:[#allocation10 + $0x60] sm:$0xff]
    %v214 = vld [vmem:[#allocation10 + $0x68] sm:$0xff]
    %v215 = vld [vmem:[#allocation10 + $0x70] sm:$0xff]
    %v216 = vld [vmem:[#allocation10 + $0x78] sm:$0xff]
    %v217 = vld [vmem:[%s6] sm:$0x3]
    %v218 = vpack.c.bf16 %v200, %v200
    %v220 = vperm.slane %v217, 0
    %v221 = vperm.slane %v217, 1
    %v240 = vunpack.c.l.b16 %v201
    %v241 = vunpack.c.h.b16 %v201
    %v242 = vunpack.c.l.b16 %v202
    %v243 = vunpack.c.h.b16 %v202
    %v244 = vunpack.c.l.b16 %v203
    %v245 = vunpack.c.h.b16 %v203
    %v246 = vunpack.c.l.b16 %v204
    %v247 = vunpack.c.h.b16 %v204
    %v248 = vunpack.c.l.b16 %v205
    %v249 = vunpack.c.h.b16 %v205
    %v250 = vunpack.c.l.b16 %v206
    %v251 = vunpack.c.h.b16 %v206
    %v252 = vunpack.c.l.b16 %v207
    %v253 = vunpack.c.h.b16 %v207
    %v254 = vunpack.c.l.b16 %v208
    %v255 = vunpack.c.h.b16 %v208
    %v256 = vunpack.c.l.b16 %v209
    %v257 = vunpack.c.h.b16 %v209
    %v258 = vunpack.c.l.b16 %v210
    %v259 = vunpack.c.h.b16 %v210
    %v260 = vunpack.c.l.b16 %v211
    %v261 = vunpack.c.h.b16 %v211
    %v262 = vunpack.c.l.b16 %v212
    %v263 = vunpack.c.h.b16 %v212
    %v264 = vunpack.c.l.b16 %v213
    %v265 = vunpack.c.h.b16 %v213
    %v266 = vunpack.c.l.b16 %v214
    %v267 = vunpack.c.h.b16 %v214
    %v268 = vunpack.c.l.b16 %v215
    %v269 = vunpack.c.h.b16 %v215
    %v270 = vunpack.c.l.b16 %v216
    %v271 = vunpack.c.h.b16 %v216
    %v272 = vpack.c.b16 %v242, %v240
    %v273 = vpack.c.b16 %v243, %v241
    %v274 = vpack.c.b16 %v246, %v244
    %v275 = vpack.c.b16 %v247, %v245
    %v276 = vpack.c.b16 %v250, %v248
    %v277 = vpack.c.b16 %v251, %v249
    %v278 = vpack.c.b16 %v254, %v252
    %v279 = vpack.c.b16 %v255, %v253
    %v280 = vpack.c.b16 %v258, %v256
    %v281 = vpack.c.b16 %v259, %v257
    %v282 = vpack.c.b16 %v262, %v260
    %v283 = vpack.c.b16 %v263, %v261
    %v284 = vpack.c.b16 %v266, %v264
    %v285 = vpack.c.b16 %v267, %v265
    %v286 = vpack.c.b16 %v270, %v268
    %v287 = vpack.c.b16 %v271, %v269
    %304 = vmatpush.bf16.msra.mxu0 %v286
    %305 = vmatpush.bf16.msra.mxu0 %v284
    %306 = vmatpush.bf16.msra.mxu0 %v282
    %307 = vmatpush.bf16.msra.mxu0 %v280
    %308 = vmatpush.bf16.msra.mxu0 %v278
    %309 = vmatpush.bf16.msra.mxu0 %v276
    %310 = vmatpush.bf16.msra.mxu0 %v274
    %311 = vmatpush.bf16.msra.mxu0 %v272
    %312 = vmatmul.bf16.gmra.mxu0 %v218
    %v313 = vpop.f32.mrf.mxu0
    %v314 = vadd.f32 %v220, %v313
    %v315 = vpop.f32.mrf.mxu0
    %316 = vdwg.mxu0
    %317 = vmatpush.bf16.msra.mxu0 %v287
    %318 = vmatpush.bf16.msra.mxu0 %v285
    %319 = vmatpush.bf16.msra.mxu0 %v283
    %320 = vmatpush.bf16.msra.mxu0 %v281
    %321 = vmatpush.bf16.msra.mxu0 %v279
    %322 = vmatpush.bf16.msra.mxu0 %v277
    %323 = vmatpush.bf16.msra.mxu0 %v275
    %324 = vmatpush.bf16.msra.mxu0 %v273
    %325 = vmatmul.bf16.gmra.mxu0 %v218
    %v326 = vpop.f32.mrf.mxu0
    %v327 = vadd.f32 %v221, %v326
    %v328 = vpop.f32.mrf.mxu0
    %329 = vdwg.mxu0
    %330 = vst [vmem:[#allocation11] sm:$0xff] %v314
    %331 = vst [vmem:[#allocation11 + $0x8] sm:$0xff] %v327
    // Predicated region
    $region50: #{tpu_custom_call.1} parent=1 // pred_check
      _
    $region51: #{tpu_custom_call.1} parent=1 // pred_check_branch
      %333 = sbr.rel (0) target = $region53
    $region52: #{tpu_custom_call.1} parent=1 // pred_region
      %335 = vsyncadd [#allocation4], 0
      %s337 = sshll.u32 [#allocation11], 4
      %s338 = int_to_ptr.vmem [resolvable:$true] %s337
      %s339 = sshll.u32 %s7, 4
      %s340 = int_to_ptr.hbm [resolvable:$true] %s339
      %342 = dma.vmem_to_hbm [thread:$0]  %s338, 256, %s340, [#allocation4]
    $region53: #{tpu_custom_call.1} parent=1 // pred_fallthru
      _
    // Predicated region
    $region54: #{tpu_custom_call.1} parent=1 // pred_check
      _
    $region55: #{tpu_custom_call.1} parent=1 // pred_check_branch
      %344 = sbr.rel (0) target = $region57
    $region56: #{tpu_custom_call.1} parent=1 // pred_region
      %346 = dma.done [#allocation4], 256
    $region57: #{tpu_custom_call.1} parent=1 // pred_fallthru
      _
    %347 = vsyncpa [#allocation3], 1
    %348 = vsyncpa [#allocation6], 1
    %349 = vsyncpa [#allocation9], 1
    %350 = vsyncpa [#allocation4], 1

</llo_original>
